<compile_context>
chip_gen: v6e
topology: v6e:2x2x1
jax: 0.10.0
libtpu: 0.0.40
codegen_flags: <defaults>
</compile_context>

<pallas_src>
import jax
import jax.numpy as jnp
from jax import lax
from jax.experimental import pallas as pl
from jax.experimental.pallas import tpu as pltpu

DECAY = 0.25          # matches `decay` in the PyTorch reference
LANE = 128
_VMEM_LIMIT = 32 * 1024 * 1024   # <= physical VMEM on v5e/v6e (128 MiB) and v7x (64 MiB)


def _round_up(x, m):
    return ((x + m - 1) // m) * m


# ---------------------------------------------------------------------------
# Kernel 1: mem_update + MultiSpike4 (LIF) over the leading time axis.
# ---------------------------------------------------------------------------
def _lif_kernel(x_ref, o_ref):
    """x_ref: (T, TR, WIDE) f32 block, o_ref: (T, TR, WIDE) bf16/f32 block.

    spike_i = round(clamp(mem_i, 0, 4));  mem_0 = x_0;
    mem_i = (mem_{i-1} - spike_{i-1}) * decay + x_i   (i >= 1)
    """
    T = x_ref.shape[0]
    mem = x_ref[0]
    spike = jnp.round(jnp.clip(mem, 0.0, 4.0))
    o_ref[0] = spike.astype(o_ref.dtype)
    for i in range(1, T):                       # T small & static -> fully unrolled
        mem = (mem - spike) * DECAY + x_ref[i]
        spike = jnp.round(jnp.clip(mem, 0.0, 4.0))
        o_ref[i] = spike.astype(o_ref.dtype)


def _lif(x, out_dtype=jnp.bfloat16):
    """x: (T, B, C, H, W) float32 -> spikes, same shape, dtype `out_dtype`.

    Viewed as (T, rows, WIDE) with WIDE up to 1024 so every vld/vst and DMA is wide and
    unmasked. Input stream stays f32 (keeps the rounding identical to the f32 reference);
    output spikes (exact integers 0..4) are streamed in `out_dtype` (bf16 halves writeback
    and feeds im2col without an extra cast pass).
    """
    T = x.shape[0]
    N = 1
    for d in x.shape[1:]:
        N *= d

    wide = next((w for w in (1024, 512, 256, 128) if N % w == 0), LANE)
    Npad = _round_up(N, wide)
    xf = x.reshape(T, N)
    if Npad != N:                                 # rare fallback; tiny pad
        xf = jnp.pad(xf, ((0, 0), (0, Npad - N)))
    rows = Npad // wide
    xf = xf.reshape(T, rows, wide)

    if rows <= 8:
        TR = rows                                  # full-dim block (allowed)
    else:
        # double-buffered f32-in + out blocks kept <= ~8 MiB (safe under v5e's 16 MiB
        # default scoped VMEM and v7x's 64 MiB physical), and aim for >= 8 grid steps.
        out_bytes = jnp.dtype(out_dtype).itemsize
        cap = (8 * 1024 * 1024) // (T * wide * (4 + out_bytes) * 2)
        cap = max(8, (cap // 8) * 8)
        target = max(8, ((rows // 8) // 8) * 8)    # ~rows/8, floored to a multiple of 8
        TR = min(cap, target)

    grid = pl.cdiv(rows, TR)                       # ragged last block is fine (masked)
    out = pl.pallas_call(
        _lif_kernel,
        out_shape=jax.ShapeDtypeStruct((T, rows, wide), out_dtype),
        grid=(grid,),
        in_specs=[pl.BlockSpec((T, TR, wide), lambda i: (0, i, 0))],
        out_specs=pl.BlockSpec((T, TR, wide), lambda i: (0, i, 0)),
        compiler_params=pltpu.CompilerParams(
            dimension_semantics=("parallel",),
            vmem_limit_bytes=_VMEM_LIMIT),
    )(xf)

    out = out.reshape(T, Npad)
    if Npad != N:
        out = out[:, :N]
    return out.reshape(x.shape)


# ---------------------------------------------------------------------------
# Kernel 2: strided conv + BatchNorm as a single im2col matmul + bias.
# ---------------------------------------------------------------------------
def _matmul_bias_kernel(p_ref, w_ref, b_ref, o_ref):
    """p_ref: (TM, Kpad) im2col rows (bf16), w_ref: (Kpad, Coutp) BN-scaled weights (bf16),
    b_ref: (1, Coutp) folded bias (f32), o_ref: (TM, Coutp) lane-dense f32 output."""
    acc = jnp.dot(p_ref[...], w_ref[...], preferred_element_type=jnp.float32)
    o_ref[...] = (acc + b_ref[...]).astype(o_ref.dtype)


def _pick_tm(M, Kpad, Coutp, in_bytes):
    """Block M-rows: as large as the VMEM budget allows, preferring >=4 grid steps."""
    if M <= 128:
        return _round_up(max(M, 8), 8)
    budget = 24 * 1024 * 1024
    w_bytes = 2 * Kpad * Coutp * in_bytes          # resident weight (worst-case 2 buffers)
    for tm in (1024, 512, 256, 128):
        blk = 2 * tm * Kpad * in_bytes + 2 * tm * Coutp * 4 + w_bytes
        if blk <= budget and (M >= 4 * tm or tm == 128):
            return tm
    return 128


def ms_downsampling(x, conv_w, conv_b, bn_gamma, bn_beta, bn_mean, bn_var,
                    *, stride=2, padding=1, first_layer=True, eps=1e-5,
                    matmul_dtype=jnp.bfloat16):
    """Forward pass of MS_DownSampling.

    x       : (T, B, Cin, H, W)  float32
    conv_w  : (Cout, Cin, KH, KW) (PyTorch OIHW), conv_b: (Cout,)
    bn_*    : (Cout,)
    returns : (T, B, Cout, Ho, Wo) float32

    matmul_dtype: bf16 default (spikes are exact in bf16; f32 MXU accumulation).
    Set jnp.float32 for a bit-exact-vs-f32 comparison or for raw first-layer inputs
    where bf16 quantization of activations is undesirable.
    """
    T, B, Cin, H, W = x.shape
    Cout, _, KH, KW = conv_w.shape
    x = x.astype(jnp.float32)

    if not first_layer:
        x = _lif(x, out_dtype=matmul_dtype)        # spikes, already in matmul dtype
    else:
        x = x.astype(matmul_dtype)

    Nimg = T * B
    Hp, Wp = H + 2 * padding, W + 2 * padding
    Ho = (Hp - KH) // stride + 1
    Wo = (Wp - KW) // stride + 1
    Kdim = KH * KW * Cin
    Kpad = _round_up(Kdim, LANE)                   # lane-aligned K (zero-padded)
    Coutp = _round_up(Cout, LANE)                  # lane-dense output columns
    M = Nimg * Ho * Wo

    # --- im2col: one NHWC transpose, static strided slices, lane-axis concat ------------
    xi = x.reshape(Nimg, Cin, H, W)
    xp = jnp.pad(xi, ((0, 0), (0, 0), (padding, padding), (padding, padding)))
    xp = xp.transpose(0, 2, 3, 1)                  # (Nimg, Hp, Wp, Cin), single relayout
    taps = []
    for r in range(KH):
        for c in range(KW):
            taps.append(xp[:, r:r + (Ho - 1) * stride + 1:stride,
                              c:c + (Wo - 1) * stride + 1:stride, :])
    if Kpad != Kdim:                               # fold K padding into the same concat
        taps.append(jnp.zeros((Nimg, Ho, Wo, Kpad - Kdim), x.dtype))
    patches = jnp.concatenate(taps, axis=-1).reshape(M, Kpad)   # (tap, cin) K-order

    # --- fold BN (inference stats) + conv bias into the weight / one bias row -----------
    w = conv_w.transpose(2, 3, 1, 0).reshape(Kdim, Cout).astype(jnp.float32)
    scale = (bn_gamma / jnp.sqrt(bn_var + eps)).astype(jnp.float32)
    bias = (bn_beta - bn_mean * scale + conv_b * scale).astype(jnp.float32)
    w = w * scale[None, :]
    w = jnp.pad(w, ((0, Kpad - Kdim), (0, Coutp - Cout))).astype(matmul_dtype)
    bias = jnp.pad(bias, (0, Coutp - Cout)).reshape(1, Coutp)

    in_bytes = jnp.dtype(matmul_dtype).itemsize
    TM = _pick_tm(M, Kpad, Coutp, in_bytes)
    grid = pl.cdiv(M, TM)                          # ragged tail handled by masked writes

    cost = pl.CostEstimate(
        flops=2 * M * Kpad * Coutp,
        transcendentals=0,
        bytes_accessed=M * Kpad * in_bytes + Kpad * Coutp * in_bytes + M * Coutp * 4)

    out = pl.pallas_call(
        _matmul_bias_kernel,
        out_shape=jax.ShapeDtypeStruct((M, Coutp), jnp.float32),
        grid=(grid,),
        in_specs=[
            pl.BlockSpec((TM, Kpad), lambda m: (m, 0)),
            pl.BlockSpec((Kpad, Coutp), lambda m: (0, 0)),   # resident BN-scaled weight
            pl.BlockSpec((1, Coutp), lambda m: (0, 0)),      # resident folded bias
        ],
        out_specs=pl.BlockSpec((TM, Coutp), lambda m: (m, 0)),
        compiler_params=pltpu.CompilerParams(
            dimension_semantics=("parallel",),
            vmem_limit_bytes=_VMEM_LIMIT),
        cost_estimate=cost,
    )(patches, w, bias)

    # TODO(synk): keep channels-last (skip this relayout) when the downstream consumer
    # accepts NHWC; kept here to match the PyTorch NCHW output contract.
    out = out[:, :Cout].reshape(T, B, Ho, Wo, Cout).transpose(0, 1, 4, 2, 3)
    return out


# ---------------------------------------------------------------------------
# Pure-JAX reference (sanity check in __main__).
# ---------------------------------------------------------------------------
def _reference(x, conv_w, conv_b, g, b, m, v, *, stride, padding, first_layer, eps=1e-5):
    T, B, Cin, H, W = x.shape
    Cout = conv_w.shape[0]
    x = x.astype(jnp.float32)
    if not first_layer:
        outs = []
        spike = jnp.zeros_like(x[0])
        mem_old = jnp.zeros_like(x[0])
        for i in range(T):
            mem = x[i] if i == 0 else (mem_old - spike) * DECAY + x[i]
            spike = jnp.round(jnp.clip(mem, 0.0, 4.0))
            mem_old = mem
            outs.append(spike)
        x = jnp.stack(outs, axis=0)
    xf = x.reshape(T * B, Cin, H, W)
    y = lax.conv_general_dilated(xf, conv_w.astype(jnp.float32), (stride, stride),
                                 [(padding, padding), (padding, padding)],
                                 dimension_numbers=("NCHW", "OIHW", "NCHW"))
    y = y + conv_b[None, :, None, None]
    scale = g / jnp.sqrt(v + eps)
    y = (y - m[None, :, None, None]) * scale[None, :, None, None] + b[None, :, None, None]
    _, _, Ho, Wo = y.shape
    return y.reshape(T, B, Cout, Ho, Wo)


if __name__ == "__main__":
    key = jax.random.PRNGKey(0)
    T, B, Cin, H, W = 2, 2, 4, 16, 16
    Cout, K, stride, pad = 32, 3, 2, 1

    k1, k2, k3, k4, k5, k6, k7 = jax.random.split(key, 7)
    x = 2.0 * jax.random.normal(k1, (T, B, Cin, H, W), jnp.float32)
    conv_w = 0.1 * jax.random.normal(k2, (Cout, Cin, K, K), jnp.float32)
    conv_b = 0.1 * jax.random.normal(k3, (Cout,), jnp.float32)
    bn_gamma = 1.0 + 0.1 * jax.random.normal(k4, (Cout,), jnp.float32)
    bn_beta = 0.1 * jax.random.normal(k5, (Cout,), jnp.float32)
    bn_mean = 0.1 * jax.random.normal(k6, (Cout,), jnp.float32)
    bn_var = 0.5 + jax.random.uniform(k7, (Cout,), jnp.float32)

    out = ms_downsampling(x, conv_w, conv_b, bn_gamma, bn_beta, bn_mean, bn_var,
                          stride=stride, padding=pad, first_layer=False)
    jax.block_until_ready(out)
    assert out.shape == (T, B, Cout, H // 2, W // 2), out.shape

    ref = _reference(x, conv_w, conv_b, bn_gamma, bn_beta, bn_mean, bn_var,
                     stride=stride, padding=pad, first_layer=False)
    max_err = float(jnp.max(jnp.abs(out - ref)))
    assert max_err < 5e-2, f"max abs err vs reference: {max_err}"
    print("KERNEL_OK")
</pallas_src>

<mosaic_0001>
module attributes {stable_mosaic.version = 11 : i64} {
  func.func @_lif_kernel(%arg0: i32, %arg1: memref<2x2x1024xf32, #tpu.memory_space<vmem>>, %arg2: memref<2x2x1024xbf16, #tpu.memory_space<vmem>>) attributes {dimension_semantics = [#tpu.dimension_semantics<parallel>], iteration_bounds = array<i64: 1>, scalar_prefetch = 0 : i64, scratch_operands = 0 : i64, tpu.core_type = #tpu.core_type<tc>, window_params = [{transform_indices = @transform_0, window_bounds = array<i64: 2, 2, 1024>}, {transform_indices = @transform_1, window_bounds = array<i64: 2, 2, 1024>}]} {
    %c0 = arith.constant 0 : index
    %c0_0 = arith.constant 0 : index
    %c0_1 = arith.constant 0 : index
    %0 = vector.load %arg1[%c0, %c0_0, %c0_1] : memref<2x2x1024xf32, #tpu.memory_space<vmem>>, vector<1x2x1024xf32>
    %1 = vector.shape_cast %0 : vector<1x2x1024xf32> to vector<2x1024xf32>
    %cst = arith.constant 0.000000e+00 : f32
    %cst_2 = arith.constant 4.000000e+00 : f32
    %2 = vector.broadcast %cst : f32 to vector<2x1024xf32>
    %3 = arith.maximumf %2, %1 : vector<2x1024xf32>
    %4 = vector.broadcast %cst_2 : f32 to vector<2x1024xf32>
    %5 = arith.minimumf %4, %3 : vector<2x1024xf32>
    %6 = math.roundeven %5 : vector<2x1024xf32>
    %7 = arith.truncf %6 : vector<2x1024xf32> to vector<2x1024xbf16>
    %c0_3 = arith.constant 0 : index
    %c0_4 = arith.constant 0 : index
    %c0_5 = arith.constant 0 : index
    %8 = vector.load %arg2[%c0_3, %c0_4, %c0_5] : memref<2x2x1024xbf16, #tpu.memory_space<vmem>>, vector<1x2x1024xbf16>
    %9 = vector.shape_cast %8 : vector<1x2x1024xbf16> to vector<2x1024xbf16>
    %10 = vector.shape_cast %7 : vector<2x1024xbf16> to vector<1x2x1024xbf16>
    tpu.vector_store %arg2[%c0_3, %c0_4, %c0_5], %10 {strides = array<i32>} : memref<2x2x1024xbf16, #tpu.memory_space<vmem>>, vector<1x2x1024xbf16>,
    %11 = arith.subf %1, %6 : vector<2x1024xf32>
    %cst_6 = arith.constant 2.500000e-01 : f32
    %12 = vector.broadcast %cst_6 : f32 to vector<2x1024xf32>
    %13 = arith.mulf %11, %12 : vector<2x1024xf32>
    %c1 = arith.constant 1 : index
    %c0_7 = arith.constant 0 : index
    %c0_8 = arith.constant 0 : index
    %14 = vector.load %arg1[%c1, %c0_7, %c0_8] : memref<2x2x1024xf32, #tpu.memory_space<vmem>>, vector<1x2x1024xf32>
    %15 = vector.shape_cast %14 : vector<1x2x1024xf32> to vector<2x1024xf32>
    %16 = arith.addf %13, %15 : vector<2x1024xf32>
    %cst_9 = arith.constant 0.000000e+00 : f32
    %cst_10 = arith.constant 4.000000e+00 : f32
    %17 = vector.broadcast %cst_9 : f32 to vector<2x1024xf32>
    %18 = arith.maximumf %17, %16 : vector<2x1024xf32>
    %19 = vector.broadcast %cst_10 : f32 to vector<2x1024xf32>
    %20 = arith.minimumf %19, %18 : vector<2x1024xf32>
    %21 = math.roundeven %20 : vector<2x1024xf32>
    %22 = arith.truncf %21 : vector<2x1024xf32> to vector<2x1024xbf16>
    %c1_11 = arith.constant 1 : index
    %c0_12 = arith.constant 0 : index
    %c0_13 = arith.constant 0 : index
    %23 = vector.load %arg2[%c1_11, %c0_12, %c0_13] : memref<2x2x1024xbf16, #tpu.memory_space<vmem>>, vector<1x2x1024xbf16>
    %24 = vector.shape_cast %23 : vector<1x2x1024xbf16> to vector<2x1024xbf16>
    %25 = vector.shape_cast %22 : vector<2x1024xbf16> to vector<1x2x1024xbf16>
    tpu.vector_store %arg2[%c1_11, %c0_12, %c0_13], %25 {strides = array<i32>} : memref<2x2x1024xbf16, #tpu.memory_space<vmem>>, vector<1x2x1024xbf16>,
    return
  }
  func.func @transform_0(%arg0: i32) -> (i32, i32, i32) {
    %c0_i32 = arith.constant 0 : i32
    %c0_i32_0 = arith.constant 0 : i32
    %c0_i32_1 = arith.constant 0 : i32
    return %c0_i32, %arg0, %c0_i32_0 : i32, i32, i32
  }
  func.func @transform_1(%arg0: i32) -> (i32, i32, i32) {
    %c0_i32 = arith.constant 0 : i32
    %c0_i32_0 = arith.constant 0 : i32
    %c0_i32_1 = arith.constant 0 : i32
    return %c0_i32, %arg0, %c0_i32_0 : i32, i32, i32
  }
}

</mosaic_0001>

<llo_original>
// kernel: tpu_custom_call.1
$region0: #{tpu_custom_call.1}
  #allocation0 [shape = 'u32[]', space=smem, size = 0x4, offset = 0x4, fixed_abs, tag = 'smem constant byte address 0x4 - core index']
  #allocation1 [shape = 'u32[144,128]{1,0:T(1,128)}', space=vmem, size = 0x12000, scoped, tag = 'internal scratch']
  %s0 = inlined_call_operand.hbm [shape: f32[2,2,1024], index: 0, kind: input, shape index: {}]
  %s1 = inlined_call_operand.hbm [shape: bf16[2,2,1024], index: 1, kind: output, shape index: {}]
  %s2 = sld [smem:[#allocation0]]
  $region18: #{tpu_custom_call.1} parent=0
    _
  %s4 = ssub.s32 1, %s2
  %s5 = scalar_select 0, %s4, %s2
  $region1: #{tpu_custom_call.1} parent=0
    #allocation2 [shape = 'u8[16384]{0}', space=vmem, size = 0x4000, scoped, tag = 'input window, operand 0, single buffered']
    #allocation3 [shape = 's32[1]{0}', space=sflag, size = 0x4, scoped, tag = 'scoped memory for tpu_custom_call.1']
    #allocation4 [shape = 's32[1]{0}', space=sflag, size = 0x4, scoped, tag = 'scoped memory for tpu_custom_call.1']
    #allocation5 [shape = 'u8[8192]{0}', space=vmem, size = 0x2000, scoped, tag = 'output window, operand 0, single buffered']
    %6 = vsyncpa [#allocation3], 0
    %7 = vsyncpa [#allocation4], 0
    // Predicated region
    $region2: #{tpu_custom_call.1} parent=1 // pred_check
      _
    $region3: #{tpu_custom_call.1} parent=1 // pred_check_branch
      %9 = sbr.rel (0) target = $region5
    $region4: #{tpu_custom_call.1} parent=1 // pred_region
      %s11 = ssub.s32 512, 512
      %12 = vsyncadd [#allocation3], %s11
      %s13 = sshll.u32 [#allocation2], 4
      %s14 = int_to_ptr.vmem [resolvable:$true] %s13
      %19 = dma.hbm_to_vmem [thread:$0]  %s0, 512, %s14, [#allocation3], 256, 256, 16
    $region5: #{tpu_custom_call.1} parent=1 // pred_fallthru
      _
    // Predicated region
    $region6: #{tpu_custom_call.1} parent=1 // pred_check
      _
    $region7: #{tpu_custom_call.1} parent=1 // pred_check_branch
      %21 = sbr.rel (0) target = $region9
    $region8: #{tpu_custom_call.1} parent=1 // pred_region
      %22 = dma.done [#allocation3], 512
    $region9: #{tpu_custom_call.1} parent=1 // pred_fallthru
      _
    %v23 = vld [vmem:[#allocation2] sm:$0xff]
    %v24 = vld [vmem:[#allocation2 + $0x8] sm:$0xff]
    %v25 = vmax.f32 %v23, 0.0
    %v26 = vmax.f32 %v24, 0.0
    %v27 = vmin.f32 %v25, 4.0
    %v28 = vmin.f32 %v26, 4.0
    %v29 = vround.ne.pseudo %v27
    %v30 = vround.ne.pseudo %v28
    %v33 = vcombine.high %v29, %v29
    %v35 = vunpack.c.l.s4 1983009808
    %v36 = vunpack.c.0.s8 %v35
    %v37 = vlaneseq
    %v38 = vshrl.u32 %v37, 7
    %v39 = vsub.s32 %v36, %v38
    %v40 = vrot.slane %v29, %v39
    %v42 = vunpack.c.l.s4 1983009808
    %v43 = vunpack.c.0.s8 %v42
    %v44 = vlaneseq
    %v45 = vshrl.u32 %v44, 7
    %v46 = vsub.s32 %v43, %v45
    %v47 = vrot.slane %v33, %v46
    %v48 = vcombine.high %v40, %v40
    %v49 = vcombine.high %v47, %v47
    %v50 = vcombine.high %v30, %v30
    %v52 = vunpack.c.l.s4 1983009808
    %v53 = vunpack.c.0.s8 %v52
    %v54 = vlaneseq
    %v55 = vshrl.u32 %v54, 7
    %v56 = vsub.s32 %v53, %v55
    %v57 = vrot.slane %v30, %v56
    %v59 = vunpack.c.l.s4 1983009808
    %v60 = vunpack.c.0.s8 %v59
    %v61 = vlaneseq
    %v62 = vshrl.u32 %v61, 7
    %v63 = vsub.s32 %v60, %v62
    %v64 = vrot.slane %v50, %v63
    %v65 = vcombine.high %v57, %v57
    %v66 = vcombine.high %v64, %v64
    %v75 = vpack.c.bf16 %v40, %v40
    %v76 = vpack.c.bf16 %v48, %v48
    %v77 = vpack.c.bf16 %v47, %v47
    %v78 = vpack.c.bf16 %v49, %v49
    %v79 = vpack.c.bf16 %v57, %v57
    %v80 = vpack.c.bf16 %v65, %v65
    %v81 = vpack.c.bf16 %v64, %v64
    %v82 = vpack.c.bf16 %v66, %v66
    %v91 = vcombine.low %v75, %v76
    %v92 = vcombine.low %v77, %v78
    %v93 = vcombine.low %v79, %v80
    %v94 = vcombine.low %v81, %v82
    %v96 = vunpack.c.l.s4 1966171168
    %v97 = vunpack.c.0.s8 %v96
    %v98 = vlaneseq
    %v99 = vshrl.u32 %v98, 7
    %v100 = vsub.s32 %v97, %v99
    %v101 = vrot.slane %v91, %v100
    %v103 = vunpack.c.l.s4 1966171168
    %v104 = vunpack.c.0.s8 %v103
    %v105 = vlaneseq
    %v106 = vshrl.u32 %v105, 7
    %v107 = vsub.s32 %v104, %v106
    %v108 = vrot.slane %v92, %v107
    %v110 = vunpack.c.l.s4 1966171168
    %v111 = vunpack.c.0.s8 %v110
    %v112 = vlaneseq
    %v113 = vshrl.u32 %v112, 7
    %v114 = vsub.s32 %v111, %v113
    %v115 = vrot.slane %v93, %v114
    %v117 = vunpack.c.l.s4 1966171168
    %v118 = vunpack.c.0.s8 %v117
    %v119 = vlaneseq
    %v120 = vshrl.u32 %v119, 7
    %v121 = vsub.s32 %v118, %v120
    %v122 = vrot.slane %v94, %v121
    %v123 = vcombine.low %v101, %v108
    %v124 = vcombine.low %v115, %v122
    %v126 = vunpack.c.l.s4 1966171168
    %v127 = vunpack.c.0.s8 %v126
    %v128 = vlaneseq
    %v129 = vshrl.u32 %v128, 7
    %v130 = vsub.s32 %v127, %v129
    %v131 = vrot.slane %v123, %v130
    %v133 = vunpack.c.l.s4 1966171168
    %v134 = vunpack.c.0.s8 %v133
    %v135 = vlaneseq
    %v136 = vshrl.u32 %v135, 7
    %v137 = vsub.s32 %v134, %v136
    %v138 = vrot.slane %v124, %v137
    %v139 = vcombine.low %v131, %v138
    %141 = vst [vmem:[#allocation5] sm:$0xff] %v139
    %v142 = vsub.f32 %v23, %v29
    %v143 = vsub.f32 %v24, %v30
    %v144 = vmul.f32 %v142, 0.25
    %v145 = vmul.f32 %v143, 0.25
    %s146 = scalar_lea.vmem [#allocation2], 16
    %v147 = vld [vmem:[%s146] sm:$0xff]
    %v148 = vld [vmem:[%s146 + $0x8] sm:$0xff]
    %v149 = vadd.f32 %v144, %v147
    %v150 = vadd.f32 %v145, %v148
    %v151 = vmax.f32 %v149, 0.0
    %v152 = vmax.f32 %v150, 0.0
    %v153 = vmin.f32 %v151, 4.0
    %v154 = vmin.f32 %v152, 4.0
    %v155 = vround.ne.pseudo %v153
    %v156 = vround.ne.pseudo %v154
    %v159 = vcombine.high %v155, %v155
    %v161 = vunpack.c.l.s4 1983009808
    %v162 = vunpack.c.0.s8 %v161
    %v163 = vlaneseq
    %v164 = vshrl.u32 %v163, 7
    %v165 = vsub.s32 %v162, %v164
    %v166 = vrot.slane %v155, %v165
    %v168 = vunpack.c.l.s4 1983009808
    %v169 = vunpack.c.0.s8 %v168
    %v170 = vlaneseq
    %v171 = vshrl.u32 %v170, 7
    %v172 = vsub.s32 %v169, %v171
    %v173 = vrot.slane %v159, %v172
    %v174 = vcombine.high %v166, %v166
    %v175 = vcombine.high %v173, %v173
    %v176 = vcombine.high %v156, %v156
    %v178 = vunpack.c.l.s4 1983009808
    %v179 = vunpack.c.0.s8 %v178
    %v180 = vlaneseq
    %v181 = vshrl.u32 %v180, 7
    %v182 = vsub.s32 %v179, %v181
    %v183 = vrot.slane %v156, %v182
    %v185 = vunpack.c.l.s4 1983009808
    %v186 = vunpack.c.0.s8 %v185
    %v187 = vlaneseq
    %v188 = vshrl.u32 %v187, 7
    %v189 = vsub.s32 %v186, %v188
    %v190 = vrot.slane %v176, %v189
    %v191 = vcombine.high %v183, %v183
    %v192 = vcombine.high %v190, %v190
    %v201 = vpack.c.bf16 %v166, %v166
    %v202 = vpack.c.bf16 %v174, %v174
    %v203 = vpack.c.bf16 %v173, %v173
    %v204 = vpack.c.bf16 %v175, %v175
    %v205 = vpack.c.bf16 %v183, %v183
    %v206 = vpack.c.bf16 %v191, %v191
    %v207 = vpack.c.bf16 %v190, %v190
    %v208 = vpack.c.bf16 %v192, %v192
    %v217 = vcombine.low %v201, %v202
    %v218 = vcombine.low %v203, %v204
    %v219 = vcombine.low %v205, %v206
    %v220 = vcombine.low %v207, %v208
    %v222 = vunpack.c.l.s4 1966171168
    %v223 = vunpack.c.0.s8 %v222
    %v224 = vlaneseq
    %v225 = vshrl.u32 %v224, 7
    %v226 = vsub.s32 %v223, %v225
    %v227 = vrot.slane %v217, %v226
    %v229 = vunpack.c.l.s4 1966171168
    %v230 = vunpack.c.0.s8 %v229
    %v231 = vlaneseq
    %v232 = vshrl.u32 %v231, 7
    %v233 = vsub.s32 %v230, %v232
    %v234 = vrot.slane %v218, %v233
    %v236 = vunpack.c.l.s4 1966171168
    %v237 = vunpack.c.0.s8 %v236
    %v238 = vlaneseq
    %v239 = vshrl.u32 %v238, 7
    %v240 = vsub.s32 %v237, %v239
    %v241 = vrot.slane %v219, %v240
    %v243 = vunpack.c.l.s4 1966171168
    %v244 = vunpack.c.0.s8 %v243
    %v245 = vlaneseq
    %v246 = vshrl.u32 %v245, 7
    %v247 = vsub.s32 %v244, %v246
    %v248 = vrot.slane %v220, %v247
    %v249 = vcombine.low %v227, %v234
    %v250 = vcombine.low %v241, %v248
    %v252 = vunpack.c.l.s4 1966171168
    %v253 = vunpack.c.0.s8 %v252
    %v254 = vlaneseq
    %v255 = vshrl.u32 %v254, 7
    %v256 = vsub.s32 %v253, %v255
    %v257 = vrot.slane %v249, %v256
    %v259 = vunpack.c.l.s4 1966171168
    %v260 = vunpack.c.0.s8 %v259
    %v261 = vlaneseq
    %v262 = vshrl.u32 %v261, 7
    %v263 = vsub.s32 %v260, %v262
    %v264 = vrot.slane %v250, %v263
    %v265 = vcombine.low %v257, %v264
    %s267 = scalar_lea.vmem [#allocation5], 8
    %268 = vst [vmem:[%s267] sm:$0xff] %v265
    // Predicated region
    $region10: #{tpu_custom_call.1} parent=1 // pred_check
      _
    $region11: #{tpu_custom_call.1} parent=1 // pred_check_branch
      %270 = sbr.rel (0) target = $region13
    $region12: #{tpu_custom_call.1} parent=1 // pred_region
      %s272 = ssub.s32 256, 256
      %273 = vsyncadd [#allocation4], %s272
      %s274 = sshll.u32 [#allocation5], 4
      %s275 = int_to_ptr.vmem [resolvable:$true] %s274
      %280 = dma.vmem_to_hbm [thread:$0]  %s275, 256, %s1, [#allocation4], 128, 128, 8
    $region13: #{tpu_custom_call.1} parent=1 // pred_fallthru
      _
    // Predicated region
    $region14: #{tpu_custom_call.1} parent=1 // pred_check
      _
    $region15: #{tpu_custom_call.1} parent=1 // pred_check_branch
      %282 = sbr.rel (0) target = $region17
    $region16: #{tpu_custom_call.1} parent=1 // pred_region
      %283 = dma.done [#allocation4], 256
    $region17: #{tpu_custom_call.1} parent=1 // pred_fallthru
      _
    %284 = vsyncpa [#allocation3], 1
    %285 = vsyncpa [#allocation4], 1

</llo_original>
